<compile_context>
chip_gen: v7x
topology: tpu7x:2x2x1
jax: 0.10.0
libtpu: 0.0.40
codegen_flags: <defaults>
</compile_context>

<pallas_src>
import functools

import jax
import jax.numpy as jnp
from jax.experimental import pallas as pl
from jax.experimental.pallas import tpu as pltpu


def _round_up(x, m):
    return ((x + m - 1) // m) * m


def _fused_kernel(obs_ref, w_ref, b_ref, out_ref, *, obs_pad, hidden2, act_dim):
    """Fused actor+critic MLP.

    obs_ref : [B, obs_pad]                      obs zero-padded to a sublane multiple
    w_ref   : [obs_pad + 2*hidden2, hidden2]    packed weights:
              rows [0, obs_pad)                 W1 = [w1a | w1v]   (zero-padded rows)
              rows [obs_pad, obs_pad+hidden2)   W2 = blockdiag(w2a, w2v)
              rows [obs_pad+hidden2, ...)       W3 = [[w3a, 0], [0, w3v]] in cols 0..act_dim
    b_ref   : [3, hidden2]                      packed biases (row 2 = [b3a | b3v | 0...])
    out_ref : [B, act_dim+1]                    cols [0, act_dim) = log-probs, col act_dim = value
    """
    obs = obs_ref[...]
    b_all = b_ref[...]

    # Static ref slices are free (sublane-aligned offsets: 0, obs_pad, obs_pad+hidden2).
    w1 = w_ref[0:obs_pad, :]
    w2 = w_ref[obs_pad:obs_pad + hidden2, :]
    w3 = w_ref[obs_pad + hidden2:obs_pad + 2 * hidden2, 0:act_dim + 1]

    h = jnp.tanh(jnp.dot(obs, w1, preferred_element_type=jnp.float32)
                 + b_all[0:1, :])
    h = jnp.tanh(jnp.dot(h, w2, preferred_element_type=jnp.float32)
                 + b_all[1:2, :])
    z = (jnp.dot(h, w3, preferred_element_type=jnp.float32)
         + b_all[2:3, 0:act_dim + 1])                       # [B, act_dim+1]

    # log-softmax over the actor columns; critic (value) column passes through.
    logits = z[:, 0:act_dim]
    m = jnp.max(logits, axis=-1, keepdims=True)
    lse = m + jnp.log(jnp.sum(jnp.exp(logits - m), axis=-1, keepdims=True))
    col = jax.lax.broadcasted_iota(jnp.int32, z.shape, 1)
    out_ref[...] = jnp.where(col < act_dim, z - lse, z)     # single lane-packed store


@functools.partial(jax.jit, static_argnames=("act_dim",))
def actor_critic_forward(obs, w_packed, b_packed, act_dim):
    """Returns (log_probs [B, act_dim], value [B, 1])."""
    batch, obs_dim = obs.shape
    hidden2 = w_packed.shape[1]
    obs_pad = _round_up(obs_dim, 8)
    obs_p = jnp.pad(obs, ((0, 0), (0, obs_pad - obs_dim)))

    kernel = functools.partial(_fused_kernel, obs_pad=obs_pad,
                               hidden2=hidden2, act_dim=act_dim)
    vmem = pl.BlockSpec(memory_space=pltpu.MemorySpace.VMEM)

    out = pl.pallas_call(
        kernel,
        out_shape=jax.ShapeDtypeStruct((batch, act_dim + 1), jnp.float32),
        in_specs=[vmem, vmem, vmem],
        out_specs=vmem,
    )(obs_p, w_packed, b_packed)

    log_probs = out[:, :act_dim]
    value = out[:, act_dim:act_dim + 1]
    return log_probs, value


def select_action(obs, w_packed, b_packed, act_dim, key):
    """Mirrors Actor_critic.select_action: sample + log_prob."""
    log_probs, _ = actor_critic_forward(obs, w_packed, b_packed, act_dim)
    action = jax.random.categorical(key, log_probs, axis=-1)
    log_prob = jnp.take_along_axis(log_probs, action[:, None], axis=-1)[:, 0]
    return action, log_prob


def evaluate(obs, action, w_packed, b_packed, act_dim):
    """Mirrors Actor_critic.evaluate: (value.squeeze(), log_prob(action))."""
    log_probs, value = actor_critic_forward(obs, w_packed, b_packed, act_dim)
    log_prob = jnp.take_along_axis(log_probs, action[:, None], axis=-1)[:, 0]
    return jnp.squeeze(value), log_prob


def init_linear(key, in_features, out_features):
    # PyTorch nn.Linear default init: U(-1/sqrt(fan_in), 1/sqrt(fan_in))
    kw, kb = jax.random.split(key)
    bound = 1.0 / jnp.sqrt(jnp.float32(in_features))
    w = jax.random.uniform(kw, (in_features, out_features), jnp.float32,
                           -bound, bound)
    b = jax.random.uniform(kb, (1, out_features), jnp.float32, -bound, bound)
    return w, b


def init_params(key, obs_dim, act_dim, hidden_dim):
    keys = jax.random.split(key, 6)
    w1a, b1a = init_linear(keys[0], obs_dim, hidden_dim)
    w2a, b2a = init_linear(keys[1], hidden_dim, hidden_dim)
    w3a, b3a = init_linear(keys[2], hidden_dim, act_dim)
    w1v, b1v = init_linear(keys[3], obs_dim, hidden_dim)
    w2v, b2v = init_linear(keys[4], hidden_dim, hidden_dim)
    w3v, b3v = init_linear(keys[5], hidden_dim, 1)
    return dict(w1a=w1a, b1a=b1a, w2a=w2a, b2a=b2a, w3a=w3a, b3a=b3a,
                w1v=w1v, b1v=b1v, w2v=w2v, b2v=b2v, w3v=w3v, b3v=b3v)


def pack_params(p, obs_dim, act_dim, hidden_dim):
    """Pack the 12 per-layer tensors into one weight buffer + one bias buffer.

    Done once at init time (not inside the forward) so no per-call packing cost.
    """
    h = hidden_dim
    h2 = 2 * h
    obs_pad = _round_up(obs_dim, 8)
    zeros = functools.partial(jnp.zeros, dtype=jnp.float32)

    # Layer 1: shared obs input -> concatenated output columns.
    w1 = jnp.concatenate([p["w1a"], p["w1v"]], axis=1)              # [obs_dim, 2H]
    w1 = jnp.pad(w1, ((0, obs_pad - obs_dim), (0, 0)))              # [obs_pad, 2H]

    # Layer 2: block-diagonal so both heads run in one dot.
    w2 = jnp.block([[p["w2a"], zeros((h, h))],
                    [zeros((h, h)), p["w2v"]]])                     # [2H, 2H]

    # Layer 3: [w3a | 0; 0 | w3v] on (act_dim | 1) output columns, padded to 2H cols.
    w3 = jnp.block([[p["w3a"], zeros((h, 1))],
                    [zeros((h, act_dim)), p["w3v"]]])               # [2H, act_dim+1]
    w3 = jnp.pad(w3, ((0, 0), (0, h2 - (act_dim + 1))))             # [2H, 2H]

    w_packed = jnp.concatenate([w1, w2, w3], axis=0)                # [obs_pad+4H, 2H]

    b1 = jnp.concatenate([p["b1a"], p["b1v"]], axis=1)              # [1, 2H]
    b2 = jnp.concatenate([p["b2a"], p["b2v"]], axis=1)              # [1, 2H]
    b3 = jnp.concatenate([p["b3a"], p["b3v"]], axis=1)              # [1, act_dim+1]
    b3 = jnp.pad(b3, ((0, 0), (0, h2 - (act_dim + 1))))             # [1, 2H]
    b_packed = jnp.concatenate([b1, b2, b3], axis=0)                # [3, 2H]

    return w_packed, b_packed


def reference_forward(obs, p):
    """Pure-JAX reference (matches the PyTorch module) for correctness check."""
    h = jnp.tanh(obs @ p["w1a"] + p["b1a"])
    h = jnp.tanh(h @ p["w2a"] + p["b2a"])
    logits = h @ p["w3a"] + p["b3a"]
    probs = jax.nn.softmax(logits, axis=-1)
    v = jnp.tanh(obs @ p["w1v"] + p["b1v"])
    v = jnp.tanh(v @ p["w2v"] + p["b2v"])
    value = v @ p["w3v"] + p["b3v"]
    return probs, value


if __name__ == "__main__":
    # CartPole-v1: obs_dim=4, act_dim=2; small hidden + batch for the demo.
    obs_dim, act_dim, hidden_dim, batch = 4, 2, 32, 8

    root = jax.random.PRNGKey(0)
    k_params, k_obs, k_sample = jax.random.split(root, 3)

    params = init_params(k_params, obs_dim, act_dim, hidden_dim)
    w_packed, b_packed = pack_params(params, obs_dim, act_dim, hidden_dim)
    obs = jax.random.normal(k_obs, (batch, obs_dim), jnp.float32)

    # Run the Pallas kernel once.
    log_probs, value = actor_critic_forward(obs, w_packed, b_packed, act_dim)
    log_probs, value = jax.block_until_ready((log_probs, value))

    # Correctness check against pure-JAX reference.
    ref_probs, ref_value = reference_forward(obs, params)
    assert jnp.allclose(jnp.exp(log_probs), ref_probs, atol=1e-5, rtol=1e-5)
    assert jnp.allclose(value, ref_value, atol=1e-5, rtol=1e-5)

    # Exercise the module's two public entry points.
    action, log_prob = select_action(obs, w_packed, b_packed, act_dim, k_sample)
    val_sq, eval_log_prob = evaluate(obs, action, w_packed, b_packed, act_dim)
    jax.block_until_ready((action, log_prob, val_sq, eval_log_prob))

    assert action.shape == (batch,)
    assert log_prob.shape == (batch,)
    assert val_sq.shape == (batch,)
    ref_lp = jnp.take_along_axis(jnp.log(ref_probs), action[:, None], axis=-1)[:, 0]
    assert jnp.allclose(log_prob, ref_lp, atol=1e-5, rtol=1e-5)
    assert jnp.allclose(val_sq, jnp.squeeze(ref_value), atol=1e-5, rtol=1e-5)

    print("KERNEL_OK")
</pallas_src>

<mosaic_0001>
module attributes {stable_mosaic.version = 11 : i64} {
  func.func @_fused_kernel(%arg0: memref<8x8xf32, #tpu.memory_space<vmem>>, %arg1: memref<136x64xf32, #tpu.memory_space<vmem>>, %arg2: memref<3x64xf32, #tpu.memory_space<vmem>>, %arg3: memref<8x3xf32, #tpu.memory_space<vmem>>) attributes {dimension_semantics = [], scalar_prefetch = 0 : i64, scratch_operands = 0 : i64, tpu.core_type = #tpu.core_type<tc>} {
    %c0 = arith.constant 0 : index
    %c0_0 = arith.constant 0 : index
    %0 = vector.load %arg0[%c0, %c0_0] : memref<8x8xf32, #tpu.memory_space<vmem>>, vector<8x8xf32>
    %c0_1 = arith.constant 0 : index
    %c0_2 = arith.constant 0 : index
    %1 = vector.load %arg2[%c0_1, %c0_2] : memref<3x64xf32, #tpu.memory_space<vmem>>, vector<3x64xf32>
    %c0_3 = arith.constant 0 : index
    %c0_4 = arith.constant 0 : index
    %2 = vector.load %arg1[%c0_3, %c0_4] : memref<136x64xf32, #tpu.memory_space<vmem>>, vector<8x64xf32>
    %c8 = arith.constant 8 : index
    %c0_5 = arith.constant 0 : index
    %3 = vector.load %arg1[%c8, %c0_5] : memref<136x64xf32, #tpu.memory_space<vmem>>, vector<64x64xf32>
    %c72 = arith.constant 72 : index
    %c0_6 = arith.constant 0 : index
    %4 = vector.load %arg1[%c72, %c0_6] : memref<136x64xf32, #tpu.memory_space<vmem>>, vector<64x3xf32>
    %cst = arith.constant dense<0.000000e+00> : vector<8x64xf32>
    %5 = tpu.matmul %0, %2, %cst {dimension_numbers = #tpu.dot_dimension_numbers<[1], [0], [0], [1], [0, 0, 1, 1], [], []>} : vector<8x8xf32>, vector<8x64xf32>, vector<8x64xf32> -> vector<8x64xf32>
    %6 = vector.extract_strided_slice %1 {offsets = [0, 0], sizes = [1, 64], strides = [1, 1]} : vector<3x64xf32> to vector<1x64xf32>
    %7 = vector.broadcast %6 : vector<1x64xf32> to vector<8x64xf32>
    %8 = arith.addf %5, %7 : vector<8x64xf32>
    %9 = math.tanh %8 : vector<8x64xf32>
    %cst_7 = arith.constant dense<0.000000e+00> : vector<8x64xf32>
    %10 = tpu.matmul %9, %3, %cst_7 {dimension_numbers = #tpu.dot_dimension_numbers<[1], [0], [0], [1], [0, 0, 1, 1], [], []>} : vector<8x64xf32>, vector<64x64xf32>, vector<8x64xf32> -> vector<8x64xf32>
    %11 = vector.extract_strided_slice %1 {offsets = [1, 0], sizes = [1, 64], strides = [1, 1]} : vector<3x64xf32> to vector<1x64xf32>
    %12 = vector.broadcast %11 : vector<1x64xf32> to vector<8x64xf32>
    %13 = arith.addf %10, %12 : vector<8x64xf32>
    %14 = math.tanh %13 : vector<8x64xf32>
    %cst_8 = arith.constant dense<0.000000e+00> : vector<8x3xf32>
    %15 = tpu.matmul %14, %4, %cst_8 {dimension_numbers = #tpu.dot_dimension_numbers<[1], [0], [0], [1], [0, 0, 1, 1], [], []>} : vector<8x64xf32>, vector<64x3xf32>, vector<8x3xf32> -> vector<8x3xf32>
    %16 = vector.extract_strided_slice %1 {offsets = [2, 0], sizes = [1, 3], strides = [1, 1]} : vector<3x64xf32> to vector<1x3xf32>
    %17 = vector.broadcast %16 : vector<1x3xf32> to vector<8x3xf32>
    %18 = arith.addf %15, %17 : vector<8x3xf32>
    %19 = vector.extract_strided_slice %18 {offsets = [0, 0], sizes = [8, 2], strides = [1, 1]} : vector<8x3xf32> to vector<8x2xf32>
    %cst_9 = arith.constant dense<0xFF800000> : vector<8xf32>
    %20 = vector.multi_reduction <maximumf>, %19, %cst_9 [1] : vector<8x2xf32> to vector<8xf32>
    %21 = vector.shape_cast %20 : vector<8xf32> to vector<8x1xf32>
    %22 = vector.broadcast %21 : vector<8x1xf32> to vector<8x2xf32>
    %23 = arith.subf %19, %22 : vector<8x2xf32>
    %24 = math.exp %23 : vector<8x2xf32>
    %cst_10 = arith.constant dense<0.000000e+00> : vector<8xf32>
    %25 = vector.multi_reduction <add>, %24, %cst_10 [1] : vector<8x2xf32> to vector<8xf32>
    %26 = vector.shape_cast %25 : vector<8xf32> to vector<8x1xf32>
    %27 = math.log %26 : vector<8x1xf32>
    %28 = arith.addf %21, %27 : vector<8x1xf32>
    %29 = tpu.iota {dimensions = array<i32: 1>} : vector<8x3xi32>
    %c2_i32 = arith.constant 2 : i32
    %30 = vector.broadcast %c2_i32 : i32 to vector<8x3xi32>
    %31 = arith.cmpi slt, %29, %30 : vector<8x3xi32>
    %32 = vector.broadcast %28 : vector<8x1xf32> to vector<8x3xf32>
    %33 = arith.subf %18, %32 : vector<8x3xf32>
    %34 = arith.select %31, %33, %18 : vector<8x3xi1>, vector<8x3xf32>
    %c0_11 = arith.constant 0 : index
    %c0_12 = arith.constant 0 : index
    %35 = vector.load %arg3[%c0_11, %c0_12] : memref<8x3xf32, #tpu.memory_space<vmem>>, vector<8x3xf32>
    tpu.vector_store %arg3[%c0_11, %c0_12], %34 {strides = array<i32>} : memref<8x3xf32, #tpu.memory_space<vmem>>, vector<8x3xf32>,
    return
  }
}

</mosaic_0001>

<llo_original>
// kernel: actor_critic_forward.1
$region0: #{actor_critic_forward.1}
  #allocation0 [shape = 'u32[]', space=smem, size = 0x4, offset = 0x4, fixed_abs, tag = 'smem constant byte address 0x4 - core index']
  #allocation1 [shape = 'u32[144,128]{1,0:T(1,128)}', space=vmem, size = 0x12000, scoped, tag = 'internal scratch']
  %s0 = inlined_call_operand.vmem [shape: f32[8,8], index: 0, kind: input, shape index: {}]
  %s1 = inlined_call_operand.vmem [shape: f32[136,64], index: 1, kind: input, shape index: {}]
  %s2 = inlined_call_operand.vmem [shape: f32[3,64], index: 2, kind: input, shape index: {}]
  %s3 = inlined_call_operand.vmem [shape: f32[8,3], index: 3, kind: output, shape index: {}]
  %s4 = sld [smem:[#allocation0]]
  $region22: #{actor_critic_forward.1} parent=0
    _
  %s6 = ssub.s32 1, %s4
  %s7 = scalar_select 0, %s6, %s4
  // Predicated region
  $region2: #{actor_critic_forward.1} parent=0 // pred_check
    _
  $region3: #{actor_critic_forward.1} parent=0 // pred_check_branch
    %9 = sbr.rel (0) target = $region5
  $region4: #{actor_critic_forward.1} parent=0 // pred_region
    _
  $region5: #{actor_critic_forward.1} parent=0 // pred_fallthru
    _
  // Predicated region
  $region6: #{actor_critic_forward.1} parent=0 // pred_check
    _
  $region7: #{actor_critic_forward.1} parent=0 // pred_check_branch
    %11 = sbr.rel (0) target = $region9
  $region8: #{actor_critic_forward.1} parent=0 // pred_region
    _
  $region9: #{actor_critic_forward.1} parent=0 // pred_fallthru
    _
  // Predicated region
  $region10: #{actor_critic_forward.1} parent=0 // pred_check
    _
  $region11: #{actor_critic_forward.1} parent=0 // pred_check_branch
    %13 = sbr.rel (0) target = $region13
  $region12: #{actor_critic_forward.1} parent=0 // pred_region
    _
  $region13: #{actor_critic_forward.1} parent=0 // pred_fallthru
    _
  %v14 = vld [vmem:[%s0] sm:$0xff]
  %v15 = vld [vmem:[%s2] sm:$0x7]
  %v16 = vld [vmem:[%s1] sm:$0xff]
  %v17 = vld [vmem:[%s1 + $0x8] sm:$0xff]
  %v18 = vld [vmem:[%s1 + $0x10] sm:$0xff]
  %v19 = vld [vmem:[%s1 + $0x18] sm:$0xff]
  %v20 = vld [vmem:[%s1 + $0x20] sm:$0xff]
  %v21 = vld [vmem:[%s1 + $0x28] sm:$0xff]
  %v22 = vld [vmem:[%s1 + $0x30] sm:$0xff]
  %v23 = vld [vmem:[%s1 + $0x38] sm:$0xff]
  %v24 = vld [vmem:[%s1 + $0x40] sm:$0xff]
  %v25 = vld [vmem:[%s1 + $0x48] sm:$0xff]
  %v26 = vld [vmem:[%s1 + $0x50] sm:$0xff]
  %v27 = vld [vmem:[%s1 + $0x58] sm:$0xff]
  %v28 = vld [vmem:[%s1 + $0x60] sm:$0xff]
  %v29 = vld [vmem:[%s1 + $0x68] sm:$0xff]
  %v30 = vld [vmem:[%s1 + $0x70] sm:$0xff]
  %v31 = vld [vmem:[%s1 + $0x78] sm:$0xff]
  %v32 = vld [vmem:[%s1 + $0x80] sm:$0xff]
  %v33 = vlaneseq
  %v34 = vshrl.u32 %v33, 7
  %v35 = vsub.s32 0, %v34
  %v36 = vrot.slane %v15, %v35
  %vm37 = vcmask 64512
  %v39 = vsel %vm37, %v14, 0
  %41 = vmatprep.subr.mxu0 0.0
  %42 = vmatpush1.msra.mxu0 %v16
  %43 = vmatprep.subr.mxu0 0.0
  %44 = vmatpush1.msra.mxu0 0.0
  %45 = vmatprep.subr.mxu0 0.0
  %46 = vmatpush1.msra.mxu0 0.0
  %47 = vmatprep.subr.mxu0 0.0
  %48 = vmatpush1.msra.mxu0 0.0
  %49 = vmatprep.subr.mxu0 0.0
  %50 = vmatpush1.msra.mxu0 0.0
  %51 = vmatprep.subr.mxu0 0.0
  %52 = vmatpush1.msra.mxu0 0.0
  %53 = vmatprep.subr.mxu0 0.0
  %54 = vmatpush1.msra.mxu0 0.0
  %55 = vmatprep.subr.mxu0 0.0
  %56 = vmatpush1.msra.mxu0 0.0
  %57 = vmatprep.subr.mxu0 0.0
  %58 = vmatpush1.msra.mxu0 0.0
  %59 = vmatprep.subr.mxu0 0.0
  %60 = vmatpush1.msra.mxu0 0.0
  %61 = vmatprep.subr.mxu0 0.0
  %62 = vmatpush1.msra.mxu0 0.0
  %63 = vmatprep.subr.mxu0 0.0
  %64 = vmatpush1.msra.mxu0 0.0
  %65 = vmatprep.subr.mxu0 0.0
  %66 = vmatpush1.msra.mxu0 0.0
  %67 = vmatprep.subr.mxu0 0.0
  %68 = vmatpush1.msra.mxu0 0.0
  %69 = vmatprep.subr.mxu0 0.0
  %70 = vmatpush1.msra.mxu0 0.0
  %71 = vmatprep.subr.mxu0 0.0
  %72 = vmatpush1.msra.mxu0 0.0
  %73 = vmatprep.subr.mxu0 0.0
  %74 = vmatpush1.msra.mxu0 0.0
  %75 = vmatprep.subr.mxu0 0.0
  %76 = vmatpush1.msra.mxu0 0.0
  %77 = vmatprep.subr.mxu0 0.0
  %78 = vmatpush1.msra.mxu0 0.0
  %79 = vmatprep.subr.mxu0 0.0
  %80 = vmatpush1.msra.mxu0 0.0
  %81 = vmatprep.subr.mxu0 0.0
  %82 = vmatpush1.msra.mxu0 0.0
  %83 = vmatprep.subr.mxu0 0.0
  %84 = vmatpush1.msra.mxu0 0.0
  %85 = vmatprep.subr.mxu0 0.0
  %86 = vmatpush1.msra.mxu0 0.0
  %87 = vmatprep.subr.mxu0 0.0
  %88 = vmatpush1.msra.mxu0 0.0
  %89 = vmatprep.subr.mxu0 0.0
  %90 = vmatpush1.msra.mxu0 0.0
  %91 = vmatprep.subr.mxu0 0.0
  %92 = vmatpush1.msra.mxu0 0.0
  %93 = vmatprep.subr.mxu0 0.0
  %94 = vmatpush1.msra.mxu0 0.0
  %95 = vmatprep.subr.mxu0 0.0
  %96 = vmatpush1.msra.mxu0 0.0
  %97 = vmatprep.subr.mxu0 0.0
  %98 = vmatpush1.msra.mxu0 0.0
  %99 = vmatprep.subr.mxu0 0.0
  %100 = vmatpush1.msra.mxu0 0.0
  %101 = vmatprep.subr.mxu0 0.0
  %102 = vmatpush1.msra.mxu0 0.0
  %103 = vmatprep.subr.mxu0 0.0
  %104 = vmatpush1.msra.mxu0 0.0
  %105 = vmatprep.mubr.f32.mxu0 0.0
  %106 = vmatmul.mubr.f32.gmra.mrb[0].mxu0 %v39
  %v107 = vpop.f32.mrb[0].mxu0
  %v108 = vadd.f32 %v36, %v107
  %v109 = vpop.f32.mrb[0].mxu0
  %110 = vdwg.mxu0
  %v111 = vtanh.pop %v108
  %v112 = vlaneseq
  %v113 = vshrl.u32 %v112, 7
  %v114 = vsub.s32 1, %v113
  %v115 = vrot.slane %v15, %v114
  %vm116 = vcmask 523264
  %v118 = vsel %vm116, %v111, 0
  %120 = vmatprep.subr.mxu0 0.0
  %121 = vmatpush1.msra.mxu0 %v17
  %122 = vmatprep.subr.mxu0 0.0
  %123 = vmatpush1.msra.mxu0 %v18
  %124 = vmatprep.subr.mxu0 0.0
  %125 = vmatpush1.msra.mxu0 %v19
  %126 = vmatprep.subr.mxu0 0.0
  %127 = vmatpush1.msra.mxu0 %v20
  %128 = vmatprep.subr.mxu0 0.0
  %129 = vmatpush1.msra.mxu0 %v21
  %130 = vmatprep.subr.mxu0 0.0
  %131 = vmatpush1.msra.mxu0 %v22
  %132 = vmatprep.subr.mxu0 0.0
  %133 = vmatpush1.msra.mxu0 %v23
  %134 = vmatprep.subr.mxu0 0.0
  %135 = vmatpush1.msra.mxu0 %v24
  %136 = vmatprep.subr.mxu0 0.0
  %137 = vmatpush1.msra.mxu0 0.0
  %138 = vmatprep.subr.mxu0 0.0
  %139 = vmatpush1.msra.mxu0 0.0
  %140 = vmatprep.subr.mxu0 0.0
  %141 = vmatpush1.msra.mxu0 0.0
  %142 = vmatprep.subr.mxu0 0.0
  %143 = vmatpush1.msra.mxu0 0.0
  %144 = vmatprep.subr.mxu0 0.0
  %145 = vmatpush1.msra.mxu0 0.0
  %146 = vmatprep.subr.mxu0 0.0
  %147 = vmatpush1.msra.mxu0 0.0
  %148 = vmatprep.subr.mxu0 0.0
  %149 = vmatpush1.msra.mxu0 0.0
  %150 = vmatprep.subr.mxu0 0.0
  %151 = vmatpush1.msra.mxu0 0.0
  %152 = vmatprep.subr.mxu0 0.0
  %153 = vmatpush1.msra.mxu0 0.0
  %154 = vmatprep.subr.mxu0 0.0
  %155 = vmatpush1.msra.mxu0 0.0
  %156 = vmatprep.subr.mxu0 0.0
  %157 = vmatpush1.msra.mxu0 0.0
  %158 = vmatprep.subr.mxu0 0.0
  %159 = vmatpush1.msra.mxu0 0.0
  %160 = vmatprep.subr.mxu0 0.0
  %161 = vmatpush1.msra.mxu0 0.0
  %162 = vmatprep.subr.mxu0 0.0
  %163 = vmatpush1.msra.mxu0 0.0
  %164 = vmatprep.subr.mxu0 0.0
  %165 = vmatpush1.msra.mxu0 0.0
  %166 = vmatprep.subr.mxu0 0.0
  %167 = vmatpush1.msra.mxu0 0.0
  %168 = vmatprep.subr.mxu0 0.0
  %169 = vmatpush1.msra.mxu0 0.0
  %170 = vmatprep.subr.mxu0 0.0
  %171 = vmatpush1.msra.mxu0 0.0
  %172 = vmatprep.subr.mxu0 0.0
  %173 = vmatpush1.msra.mxu0 0.0
  %174 = vmatprep.subr.mxu0 0.0
  %175 = vmatpush1.msra.mxu0 0.0
  %176 = vmatprep.subr.mxu0 0.0
  %177 = vmatpush1.msra.mxu0 0.0
  %178 = vmatprep.subr.mxu0 0.0
  %179 = vmatpush1.msra.mxu0 0.0
  %180 = vmatprep.subr.mxu0 0.0
  %181 = vmatpush1.msra.mxu0 0.0
  %182 = vmatprep.subr.mxu0 0.0
  %183 = vmatpush1.msra.mxu0 0.0
  %184 = vmatprep.mubr.f32.mxu0 0.0
  %185 = vmatmul.mubr.f32.gmra.mrb[0].mxu0 %v118
  %v186 = vpop.f32.mrb[0].mxu0
  %v187 = vadd.f32 %v115, %v186
  %v188 = vpop.f32.mrb[0].mxu0
  %189 = vdwg.mxu0
  %v190 = vtanh.pop %v187
  %v191 = vlaneseq
  %v192 = vshrl.u32 %v191, 7
  %v193 = vsub.s32 2, %v192
  %v194 = vrot.slane %v15, %v193
  %v196 = vsel %vm116, %v190, 0
  %198 = vmatprep.subr.mxu0 0.0
  %199 = vmatpush1.msra.mxu0 %v25
  %200 = vmatprep.subr.mxu0 0.0
  %201 = vmatpush1.msra.mxu0 %v26
  %202 = vmatprep.subr.mxu0 0.0
  %203 = vmatpush1.msra.mxu0 %v27
  %204 = vmatprep.subr.mxu0 0.0
  %205 = vmatpush1.msra.mxu0 %v28
  %206 = vmatprep.subr.mxu0 0.0
  %207 = vmatpush1.msra.mxu0 %v29
  %208 = vmatprep.subr.mxu0 0.0
  %209 = vmatpush1.msra.mxu0 %v30
  %210 = vmatprep.subr.mxu0 0.0
  %211 = vmatpush1.msra.mxu0 %v31
  %212 = vmatprep.subr.mxu0 0.0
  %213 = vmatpush1.msra.mxu0 %v32
  %214 = vmatprep.subr.mxu0 0.0
  %215 = vmatpush1.msra.mxu0 0.0
  %216 = vmatprep.subr.mxu0 0.0
  %217 = vmatpush1.msra.mxu0 0.0
  %218 = vmatprep.subr.mxu0 0.0
  %219 = vmatpush1.msra.mxu0 0.0
  %220 = vmatprep.subr.mxu0 0.0
  %221 = vmatpush1.msra.mxu0 0.0
  %222 = vmatprep.subr.mxu0 0.0
  %223 = vmatpush1.msra.mxu0 0.0
  %224 = vmatprep.subr.mxu0 0.0
  %225 = vmatpush1.msra.mxu0 0.0
  %226 = vmatprep.subr.mxu0 0.0
  %227 = vmatpush1.msra.mxu0 0.0
  %228 = vmatprep.subr.mxu0 0.0
  %229 = vmatpush1.msra.mxu0 0.0
  %230 = vmatprep.subr.mxu0 0.0
  %231 = vmatpush1.msra.mxu0 0.0
  %232 = vmatprep.subr.mxu0 0.0
  %233 = vmatpush1.msra.mxu0 0.0
  %234 = vmatprep.subr.mxu0 0.0
  %235 = vmatpush1.msra.mxu0 0.0
  %236 = vmatprep.subr.mxu0 0.0
  %237 = vmatpush1.msra.mxu0 0.0
  %238 = vmatprep.subr.mxu0 0.0
  %239 = vmatpush1.msra.mxu0 0.0
  %240 = vmatprep.subr.mxu0 0.0
  %241 = vmatpush1.msra.mxu0 0.0
  %242 = vmatprep.subr.mxu0 0.0
  %243 = vmatpush1.msra.mxu0 0.0
  %244 = vmatprep.subr.mxu0 0.0
  %245 = vmatpush1.msra.mxu0 0.0
  %246 = vmatprep.subr.mxu0 0.0
  %247 = vmatpush1.msra.mxu0 0.0
  %248 = vmatprep.subr.mxu0 0.0
  %249 = vmatpush1.msra.mxu0 0.0
  %250 = vmatprep.subr.mxu0 0.0
  %251 = vmatpush1.msra.mxu0 0.0
  %252 = vmatprep.subr.mxu0 0.0
  %253 = vmatpush1.msra.mxu0 0.0
  %254 = vmatprep.subr.mxu0 0.0
  %255 = vmatpush1.msra.mxu0 0.0
  %256 = vmatprep.subr.mxu0 0.0
  %257 = vmatpush1.msra.mxu0 0.0
  %258 = vmatprep.subr.mxu0 0.0
  %259 = vmatpush1.msra.mxu0 0.0
  %260 = vmatprep.subr.mxu0 0.0
  %261 = vmatpush1.msra.mxu0 0.0
  %262 = vmatprep.mubr.f32.mxu0 0.0
  %263 = vmatmul.mubr.f32.gmra.mrb[0].mxu0 %v196
  %v264 = vpop.f32.mrb[0].mxu0
  %v265 = vadd.f32 %v194, %v264
  %v266 = vpop.f32.mrb[0].mxu0
  %267 = vdwg.mxu0
  %vm268 = vcmask 15360
  %v269 = vsel %vm268, %v265, -inf
  %270 = vmax.xlane.f32.xlu0 %v269
  %v271 = vpop.xlane.xlu0 %270
  %v272 = vsub.f32 %v265, %v271
  %v273 = vmul.f32 %v272, 1.442695
  %v274 = vpow.pop %v273
  %v275 = vsel %vm268, %v274, 0.0
  %276 = vadd.xlane.f32.xlu0 %v275
  %v277 = vpop.xlane.xlu0 %276
  %v278 = vlog2.pop %v277
  %v279 = vmul.f32 %v278, 0.6931472
  %v280 = vadd.f32 %v271, %v279
  %v281 = vlaneseq
  %v282 = vand.u32 %v281, 127
  %vm283 = vcmp.lt.s32.totalorder %v282, 2
  %v284 = vsub.f32 %v265, %v280
  %v285 = vsel %vm283, %v284, %v265
  %vm286 = vcmask 23552
  %287 = vst.msk [vmem:[%s3] sm:$0xff] %vm286, %v285
  // Predicated region
  $region14: #{actor_critic_forward.1} parent=0 // pred_check
    _
  $region15: #{actor_critic_forward.1} parent=0 // pred_check_branch
    %289 = sbr.rel (0) target = $region17
  $region16: #{actor_critic_forward.1} parent=0 // pred_region
    _
  $region17: #{actor_critic_forward.1} parent=0 // pred_fallthru
    _
  // Predicated region
  $region18: #{actor_critic_forward.1} parent=0 // pred_check
    _
  $region19: #{actor_critic_forward.1} parent=0 // pred_check_branch
    %291 = sbr.rel (0) target = $region21
  $region20: #{actor_critic_forward.1} parent=0 // pred_region
    _
  $region21: #{actor_critic_forward.1} parent=0 // pred_fallthru
    _

</llo_original>
